<compile_context>
chip_gen: v7x
topology: tpu7x:2x2x1
jax: 0.10.0
libtpu: 0.0.40
codegen_flags: <defaults>
</compile_context>

<pallas_src>
import jax
import jax.numpy as jnp
from jax.experimental import pallas as pl
from jax.experimental.pallas import tpu as pltpu


def _negate_kernel(h_b_ref, out_ref):
    # Elementwise negate on the VPU; output block stays lane-dense (full D).
    out_ref[...] = -h_b_ref[...]


def _sublane_quantum(dtype) -> int:
    # Sublane packing quantum: 8 rows for 32-bit, 16 for 16-bit, 32 for 8-bit.
    itemsize = jnp.dtype(dtype).itemsize
    return {4: 8, 2: 16, 1: 32}.get(itemsize, 8)


def _negate_pallas(h_b):
    """Return -h_b via a tiled, pipelined Pallas streaming kernel."""
    orig_shape = h_b.shape
    x = h_b.reshape(1, -1) if h_b.ndim == 1 else h_b.reshape(-1, orig_shape[-1])
    rows, D = x.shape
    dtype_bytes = jnp.dtype(x.dtype).itemsize
    quantum = _sublane_quantum(x.dtype)

    # Tile the batch (row) axis, keep the full embedding dim per block so the
    # last dim equals the array dim (satisfies the (8,128) rule even for
    # D < 128 and keeps stores unmasked / lane-dense).
    #
    # VMEM budget: 1 input + 1 output, double-buffered => ~4x the tile bytes.
    # Cap a single tile at ~2 MiB so total pipeline footprint (~8 MiB) fits
    # the smallest scoped-VMEM default (16 MiB on v5e) and is far below
    # v7x's 64 MiB physical VMEM, while still being large enough (>= 512
    # rows for D <= 1024 f32) to reach ~85% of the HBM roofline.
    max_tile_bytes = 2 * 1024 * 1024
    tb = (max_tile_bytes // max(1, D * dtype_bytes)) // quantum * quantum
    tb = max(quantum, min(tb, 1024))
    if tb >= rows:
        # Whole array fits in one block; full-extent block is always legal.
        tb = rows

    grid = (pl.cdiv(rows, tb),)
    spec = pl.BlockSpec((tb, D), lambda i: (i, 0))

    out = pl.pallas_call(
        _negate_kernel,
        out_shape=jax.ShapeDtypeStruct((rows, D), x.dtype),
        grid_spec=pltpu.PrefetchScalarGridSpec(
            num_scalar_prefetch=0,
            grid=grid,
            in_specs=[spec],
            out_specs=spec,
        ),
        compiler_params=pltpu.CompilerParams(
            # Batch axis is fully parallel -> shards across the 2 TensorCores
            # on v7x when the grid has >= 2 steps.
            dimension_semantics=("parallel",),
        ),
    )(x)
    return out.reshape(orig_shape)


# Below this many elements, per-call / per-grid-step overhead (~0.35 us/step)
# dwarfs the ~KiB of work, so a plain jnp negate is faster.
_SMALL_ELEMENT_THRESHOLD = 1 << 16


def complex_conjugate(h, *, force_pallas: bool = False):
    """h: tuple (h_a, h_b) of identically-shaped arrays -> (h_a, -h_b)."""
    h_a, h_b = h
    assert h_a.shape == h_b.shape and h_a.dtype == h_b.dtype

    # Real part is untouched: return it as-is, never stream it through HBM.
    if not force_pallas and h_b.size < _SMALL_ELEMENT_THRESHOLD:
        return (h_a, -h_b)  # tiny-input fast path, skip kernel launch
    return (h_a, _negate_pallas(h_b))


if __name__ == "__main__":
    key = jax.random.PRNGKey(0)
    k_a, k_b = jax.random.split(key)

    B, D = 8, 128  # small batch of complex embeddings in C^D
    h_a = jax.random.normal(k_a, (B, D), dtype=jnp.float32)
    h_b = jax.random.normal(k_b, (B, D), dtype=jnp.float32)

    # force_pallas=True so the test exercises the kernel even at tiny shape.
    out_a, out_b = complex_conjugate((h_a, h_b), force_pallas=True)
    jax.block_until_ready((out_a, out_b))

    # Reference check against the PyTorch semantics: (h_a, -h_b).
    assert jnp.array_equal(out_a, h_a)
    assert jnp.array_equal(out_b, -h_b)

    # Also sanity-check the small-input fast path (pure jnp).
    fa, fb = complex_conjugate((h_a, h_b))
    assert jnp.array_equal(fa, h_a) and jnp.array_equal(fb, -h_b)

    print("KERNEL_OK")
</pallas_src>

<mosaic_0001>
module attributes {stable_mosaic.version = 11 : i64} {
  func.func @_negate_kernel(%arg0: i32, %arg1: memref<8x128xf32, #tpu.memory_space<vmem>>, %arg2: memref<8x128xf32, #tpu.memory_space<vmem>>) attributes {dimension_semantics = [#tpu.dimension_semantics<parallel>], iteration_bounds = array<i64: 1>, scalar_prefetch = 0 : i64, scratch_operands = 0 : i64, tpu.core_type = #tpu.core_type<tc>, window_params = [{transform_indices = @transform_0, window_bounds = array<i64: 8, 128>}, {transform_indices = @transform_1, window_bounds = array<i64: 8, 128>}]} {
    %c0 = arith.constant 0 : index
    %c0_0 = arith.constant 0 : index
    %0 = vector.load %arg1[%c0, %c0_0] : memref<8x128xf32, #tpu.memory_space<vmem>>, vector<8x128xf32>
    %cst = arith.constant 0.000000e+00 : f32
    %1 = vector.broadcast %cst : f32 to vector<8x128xf32>
    %2 = arith.subf %1, %0 : vector<8x128xf32>
    %c0_1 = arith.constant 0 : index
    %c0_2 = arith.constant 0 : index
    %3 = vector.load %arg2[%c0_1, %c0_2] : memref<8x128xf32, #tpu.memory_space<vmem>>, vector<8x128xf32>
    tpu.vector_store %arg2[%c0_1, %c0_2], %2 {strides = array<i32>} : memref<8x128xf32, #tpu.memory_space<vmem>>, vector<8x128xf32>,
    return
  }
  func.func @transform_0(%arg0: i32) -> (i32, i32) {
    %c0_i32 = arith.constant 0 : i32
    %c0_i32_0 = arith.constant 0 : i32
    return %arg0, %c0_i32 : i32, i32
  }
  func.func @transform_1(%arg0: i32) -> (i32, i32) {
    %c0_i32 = arith.constant 0 : i32
    %c0_i32_0 = arith.constant 0 : i32
    return %arg0, %c0_i32 : i32, i32
  }
}

</mosaic_0001>

<llo_original>
// kernel: tpu_custom_call.1
$region0: #{tpu_custom_call.1}
  #allocation0 [shape = 'u32[]', space=smem, size = 0x4, offset = 0x4, fixed_abs, tag = 'smem constant byte address 0x4 - core index']
  #allocation1 [shape = 'u32[144,128]{1,0:T(1,128)}', space=vmem, size = 0x12000, scoped, tag = 'internal scratch']
  %s0 = inlined_call_operand.hbm [shape: f32[8,128], index: 0, kind: input, shape index: {}]
  %s1 = inlined_call_operand.hbm [shape: f32[8,128], index: 1, kind: output, shape index: {}]
  %s2 = sld [smem:[#allocation0]]
  $region18: #{tpu_custom_call.1} parent=0
    _
  %s4 = ssub.s32 1, %s2
  %s5 = scalar_select 0, %s4, %s2
  $region1: #{tpu_custom_call.1} parent=0
    #allocation2 [shape = 'u8[4096]{0}', space=vmem, size = 0x1000, scoped, tag = 'input window, operand 0, single buffered']
    #allocation3 [shape = 's32[1]{0}', space=sflag, size = 0x4, scoped, tag = 'scoped memory for tpu_custom_call.1']
    #allocation4 [shape = 's32[1]{0}', space=sflag, size = 0x4, scoped, tag = 'scoped memory for tpu_custom_call.1']
    #allocation5 [shape = 'u8[4096]{0}', space=vmem, size = 0x1000, scoped, tag = 'output window, operand 0, single buffered']
    %6 = vsyncpa [#allocation3], 0
    %7 = vsyncpa [#allocation4], 0
    // Predicated region
    $region2: #{tpu_custom_call.1} parent=1 // pred_check
      _
    $region3: #{tpu_custom_call.1} parent=1 // pred_check_branch
      %9 = sbr.rel (0) target = $region5
    $region4: #{tpu_custom_call.1} parent=1 // pred_region
      %s11 = ssub.s32 128, 128
      %12 = vsyncadd [#allocation3], %s11
      %s14 = sshll.u32 [#allocation2], 4
      %s15 = int_to_ptr.vmem [resolvable:$true] %s14
      %17 = dma.hbm_to_vmem [thread:$0]  %s0, 128, %s15, [#allocation3]
    $region5: #{tpu_custom_call.1} parent=1 // pred_fallthru
      _
    // Predicated region
    $region6: #{tpu_custom_call.1} parent=1 // pred_check
      _
    $region7: #{tpu_custom_call.1} parent=1 // pred_check_branch
      %19 = sbr.rel (0) target = $region9
    $region8: #{tpu_custom_call.1} parent=1 // pred_region
      %20 = dma.done [#allocation3], 128
    $region9: #{tpu_custom_call.1} parent=1 // pred_fallthru
      _
    %v21 = vld [vmem:[#allocation2] sm:$0xff]
    %v22 = vsub.f32 0.0, %v21
    %23 = vst [vmem:[#allocation5] sm:$0xff] %v22
    // Predicated region
    $region10: #{tpu_custom_call.1} parent=1 // pred_check
      _
    $region11: #{tpu_custom_call.1} parent=1 // pred_check_branch
      %25 = sbr.rel (0) target = $region13
    $region12: #{tpu_custom_call.1} parent=1 // pred_region
      %s27 = ssub.s32 128, 128
      %28 = vsyncadd [#allocation4], %s27
      %s30 = sshll.u32 [#allocation5], 4
      %s31 = int_to_ptr.vmem [resolvable:$true] %s30
      %33 = dma.vmem_to_hbm [thread:$0]  %s31, 128, %s1, [#allocation4]
    $region13: #{tpu_custom_call.1} parent=1 // pred_fallthru
      _
    // Predicated region
    $region14: #{tpu_custom_call.1} parent=1 // pred_check
      _
    $region15: #{tpu_custom_call.1} parent=1 // pred_check_branch
      %35 = sbr.rel (0) target = $region17
    $region16: #{tpu_custom_call.1} parent=1 // pred_region
      %36 = dma.done [#allocation4], 128
    $region17: #{tpu_custom_call.1} parent=1 // pred_fallthru
      _
    %37 = vsyncpa [#allocation3], 1
    %38 = vsyncpa [#allocation4], 1

</llo_original>
